<compile_context>
chip_gen: v6e
topology: v6e:2x2x1
jax: 0.10.0
libtpu: 0.0.40
codegen_flags: <defaults>
</compile_context>

<pallas_src>
import functools
import math

import jax
import jax.numpy as jnp
from jax import lax
from jax.experimental import pallas as pl
from jax.experimental.pallas import tpu as pltpu


# --------------------------------------------------------------------------
# Helpers: layout / tiling choices (all static, trace-time Python).
# --------------------------------------------------------------------------
def _round_up(x, m):
    return ((x + m - 1) // m) * m


def _fold_factor(N):
    """Fold k consecutive samples into lanes so the lane width is a multiple of 128."""
    if N % 128 == 0:
        return 1
    return 128 // math.gcd(N, 128)


def _sublane_granularity(itemsize):
    # 8 sublanes per vreg at 32-bit; sub-32-bit dtypes pack along sublanes.
    return 8 * max(1, 4 // itemsize)


def _choose_tm(Mr, Nf, itemsize, target_bytes=4 << 20, tm_cap=4096):
    """Row tile: ~4 MiB per input buffer, multiple of sublane granularity."""
    g = _sublane_granularity(itemsize)
    tm = max(g, target_bytes // max(1, Nf * itemsize))
    tm = min(tm, tm_cap)
    tm = min(tm, _round_up(max(Mr, 1), g))   # no point exceeding the data extent
    tm = max(g, (tm // g) * g)
    return tm


def _vmem_limit(nbytes):
    return int(min(max(nbytes, 16 << 20), 100 << 20))


# --------------------------------------------------------------------------
# Kernel 1: per-lane sum and sum-of-squares over the row axis.
#   grid = (n_splits, tiles_per_split); the leading axis is "parallel" so
#   megacore chips split the reduction; each split owns its own partial
#   accumulator block.  The hot loop accumulates into a sublane-wide vreg
#   slab (pure VALU adds); the final cross-sublane + k-group fold happens
#   once in JAX glue on a tiny array.
# --------------------------------------------------------------------------
def _reduce_kernel(x_ref, sum_ref, sumsq_ref):
    @pl.when(pl.program_id(1) == 0)
    def _():
        sum_ref[...] = jnp.zeros_like(sum_ref)
        sumsq_ref[...] = jnp.zeros_like(sumsq_ref)

    slab = sum_ref.shape[0]                 # rows per accumulation slab
    nslab = x_ref.shape[0] // slab

    def body(g, carry):
        s, q = carry
        start = pl.multiple_of(g * slab, slab)
        blk = x_ref[pl.ds(start, slab), :].astype(jnp.float32)
        return s + blk, q + blk * blk

    zero = jnp.zeros(sum_ref.shape, jnp.float32)
    s, q = lax.fori_loop(0, nslab, body, (zero, zero))
    sum_ref[...] += s
    sumsq_ref[...] += q


def _feature_sums(x2d, tm, slab, n_splits):
    """x2d: (Mp, Nf) -> per-lane partial (n_splits*slab, Nf) sums / sums of squares."""
    Mp, Nf = x2d.shape
    tiles_per_split = Mp // (n_splits * tm)
    itemsize = jnp.dtype(x2d.dtype).itemsize
    vmem = _vmem_limit(
        2 * tm * Nf * itemsize              # double-buffered input tile
        + 4 * slab * Nf * 4                 # output accumulators (x2)
        + 4 * slab * Nf * 4                 # loop carries + cast slab
        + (4 << 20)                         # headroom
    )
    return pl.pallas_call(
        _reduce_kernel,
        out_shape=(
            jax.ShapeDtypeStruct((n_splits * slab, Nf), jnp.float32),
            jax.ShapeDtypeStruct((n_splits * slab, Nf), jnp.float32),
        ),
        grid_spec=pltpu.PrefetchScalarGridSpec(
            num_scalar_prefetch=0,
            grid=(n_splits, tiles_per_split),
            in_specs=[
                pl.BlockSpec((tm, Nf),
                             lambda p, i: (p * tiles_per_split + i, 0)),
            ],
            out_specs=(
                pl.BlockSpec((slab, Nf), lambda p, i: (p, 0)),
                pl.BlockSpec((slab, Nf), lambda p, i: (p, 0)),
            ),
        ),
        compiler_params=pltpu.CompilerParams(
            dimension_semantics=("parallel", "arbitrary"),
            vmem_limit_bytes=vmem,
        ),
    )(x2d)


# --------------------------------------------------------------------------
# Kernel 2: out = x * scale + shift  (scale/shift packed as one (2, Nf) input).
# --------------------------------------------------------------------------
def _normalize_kernel(x_ref, ss_ref, o_ref):
    x = x_ref[...].astype(jnp.float32)
    scale = ss_ref[0:1, :]
    shift = ss_ref[1:2, :]
    o_ref[...] = (x * scale + shift).astype(o_ref.dtype)


def _normalize(x2d, scale_shift, tm):
    Mp, Nf = x2d.shape
    itemsize = jnp.dtype(x2d.dtype).itemsize
    vmem = _vmem_limit(
        2 * tm * Nf * itemsize              # input double buffer
        + 2 * tm * Nf * itemsize            # output double buffer
        + tm * Nf * 4                       # f32 intermediate
        + 4 * Nf * 4                        # scale/shift
        + (4 << 20)                         # headroom
    )
    return pl.pallas_call(
        _normalize_kernel,
        out_shape=jax.ShapeDtypeStruct((Mp, Nf), x2d.dtype),
        grid_spec=pltpu.PrefetchScalarGridSpec(
            num_scalar_prefetch=0,
            grid=(Mp // tm,),
            in_specs=[
                pl.BlockSpec((tm, Nf), lambda i: (i, 0)),
                pl.BlockSpec((2, Nf), lambda i: (0, 0)),
            ],
            out_specs=pl.BlockSpec((tm, Nf), lambda i: (i, 0)),
        ),
        compiler_params=pltpu.CompilerParams(
            dimension_semantics=("parallel",),
            vmem_limit_bytes=vmem,
        ),
    )(x2d, scale_shift)


# --------------------------------------------------------------------------
# Functional Normalizer (buffers carried as explicit state).
# --------------------------------------------------------------------------
def init_normalizer_state(size, max_accumulation=10 ** 6, std_epsilon=1e-8):
    return {
        "max_accumulation": jnp.asarray(max_accumulation, jnp.float32),
        "std_epsilon": jnp.asarray(std_epsilon, jnp.float32),
        "acc_count": jnp.zeros((1,), jnp.float32),
        "num_acc": jnp.zeros((1,), jnp.float32),
        "acc_sum": jnp.zeros((size,), jnp.float32),
        "acc_sum_squared": jnp.zeros((size,), jnp.float32),
    }


@functools.partial(jax.jit, static_argnames=("accumulate",))
def normalizer_forward(state, batched_data, accumulate=True):
    """Forward pass of Normalizer. Returns (normalized, new_state)."""
    B, L, N = batched_data.shape
    M = B * L

    # --- static layout decisions ------------------------------------------
    k = _fold_factor(N)                         # samples folded into lanes
    Nf = k * N                                  # lane width (multiple of 128)
    Mr = pl.cdiv(M, k)                          # folded rows actually carrying data
    itemsize = jnp.dtype(batched_data.dtype).itemsize
    slab = _sublane_granularity(itemsize)
    tm = _choose_tm(Mr, Nf, itemsize)
    n_splits = 2 if pl.cdiv(Mr, tm) >= 2 else 1  # shard reduce across 2 cores
    Mp = _round_up(Mr, n_splits * tm)            # padded folded row count

    # --- single zero-pad + free (contiguous) reshape into folded layout ----
    x_flat = batched_data.reshape(M, N)
    pad_rows = Mp * k - M
    if pad_rows:
        # Zero padding is exact for sum/sumsq; padded rows are dropped below.
        x_flat = jnp.pad(x_flat, ((0, pad_rows), (0, 0)))
    x2d = x_flat.reshape(Mp, Nf)                # native dtype, no up-cast

    new_state = dict(state)
    if accumulate:
        psum, psumsq = _feature_sums(x2d, tm=tm, slab=slab, n_splits=n_splits)
        # Fold (n_splits*slab, k*N) partials -> per-feature (N,) totals.
        data_sum = psum.reshape(-1, k, N).sum(axis=(0, 1))
        data_sum_sq = psumsq.reshape(-1, k, N).sum(axis=(0, 1))

        do_acc = state["num_acc"][0] < state["max_accumulation"]
        new_state["acc_sum"] = jnp.where(
            do_acc, state["acc_sum"] + data_sum, state["acc_sum"])
        new_state["acc_sum_squared"] = jnp.where(
            do_acc, state["acc_sum_squared"] + data_sum_sq,
            state["acc_sum_squared"])
        new_state["acc_count"] = jnp.where(
            do_acc, state["acc_count"] + jnp.float32(M), state["acc_count"])
        new_state["num_acc"] = jnp.where(
            do_acc, state["num_acc"] + 1.0, state["num_acc"])

    # Per-feature mean / std-with-eps (tiny scalar glue, matches PyTorch math).
    safe_count = jnp.maximum(new_state["acc_count"], 1.0)          # (1,)
    mean = new_state["acc_sum"] / safe_count                       # (N,)
    var = new_state["acc_sum_squared"] / safe_count - mean * mean
    var = jnp.maximum(var, 0.0)        # guard E[x^2]-mean^2 cancellation -> NaN
    std = jnp.sqrt(var)
    std_eps = jnp.maximum(std, new_state["std_epsilon"])
    scale = 1.0 / std_eps                                          # (N,)
    shift = -mean * scale                                          # (N,)

    # Tile to the folded lane layout and pack into a single (2, Nf) operand.
    scale_f = jnp.tile(scale, k).reshape(1, Nf)
    shift_f = jnp.tile(shift, k).reshape(1, Nf)
    ss = jnp.concatenate([scale_f, shift_f], axis=0).astype(jnp.float32)

    out2d = _normalize(x2d, ss, tm=tm)
    out = out2d.reshape(Mp * k, N)[:M].reshape(B, L, N)
    return out, new_state


# --------------------------------------------------------------------------
# Reference (pure JAX) for sanity check.
# --------------------------------------------------------------------------
def _reference_forward(state, batched_data):
    B, L, N = batched_data.shape
    x2d = batched_data.reshape(B * L, N).astype(jnp.float32)
    acc_sum = state["acc_sum"] + x2d.sum(0)
    acc_sum_sq = state["acc_sum_squared"] + (x2d ** 2).sum(0)
    acc_count = state["acc_count"] + B * L
    safe_count = jnp.maximum(acc_count, 1.0)
    mean = acc_sum / safe_count
    std = jnp.sqrt(jnp.maximum(acc_sum_sq / safe_count - mean ** 2, 0.0))
    std = jnp.maximum(std, state["std_epsilon"])
    return (batched_data - mean) / std


if __name__ == "__main__":
    key = jax.random.PRNGKey(0)
    B, L, N = 2, 8, 32
    x = jax.random.normal(key, (B, L, N), dtype=jnp.float32) * 3.0 + 1.5

    state = init_normalizer_state(N)

    out, new_state = normalizer_forward(state, x, accumulate=True)
    out = jax.block_until_ready(out)

    ref = _reference_forward(state, x)
    assert jnp.allclose(out, ref, atol=1e-4, rtol=1e-4), "mismatch vs reference"
    assert jnp.allclose(new_state["acc_count"], jnp.array([B * L], jnp.float32))
    assert jnp.allclose(new_state["num_acc"], jnp.array([1.0], jnp.float32))

    # Second call exercises the accumulated-state path.
    out2, state2 = normalizer_forward(new_state, x, accumulate=True)
    out2 = jax.block_until_ready(out2)
    assert jnp.allclose(state2["num_acc"], jnp.array([2.0], jnp.float32))
    assert jnp.allclose(state2["acc_count"], jnp.array([2.0 * B * L], jnp.float32))

    # accumulate=False path (normalize with existing stats only).
    out3, state3 = normalizer_forward(state2, x, accumulate=False)
    out3 = jax.block_until_ready(out3)
    assert jnp.allclose(state3["num_acc"], state2["num_acc"])

    print("KERNEL_OK")
</pallas_src>

<mosaic_0001>
module attributes {stable_mosaic.version = 11 : i64} {
  func.func @_reduce_kernel(%arg0: i32, %arg1: i32, %arg2: memref<8x128xf32, #tpu.memory_space<vmem>>, %arg3: memref<8x128xf32, #tpu.memory_space<vmem>>, %arg4: memref<8x128xf32, #tpu.memory_space<vmem>>) attributes {dimension_semantics = [#tpu.dimension_semantics<parallel>, #tpu.dimension_semantics<arbitrary>], iteration_bounds = array<i64: 1, 1>, scalar_prefetch = 0 : i64, scratch_operands = 0 : i64, tpu.core_type = #tpu.core_type<tc>, window_params = [{transform_indices = @transform_0, window_bounds = array<i64: 8, 128>}, {transform_indices = @transform_1, window_bounds = array<i64: 8, 128>}, {transform_indices = @transform_2, window_bounds = array<i64: 8, 128>}]} {
    %c0_i32 = arith.constant 0 : i32
    %0 = arith.cmpi eq, %arg1, %c0_i32 : i32
    %1 = arith.extui %0 : i1 to i32
    %c0_i32_0 = arith.constant 0 : i32
    %2 = arith.cmpi ne, %1, %c0_i32_0 : i32
    scf.if %2 {
      %cst_10 = arith.constant 0.000000e+00 : f32
      %17 = vector.broadcast %cst_10 : f32 to vector<8x128xf32>
      %c0_11 = arith.constant 0 : index
      %c0_12 = arith.constant 0 : index
      %18 = vector.load %arg3[%c0_11, %c0_12] : memref<8x128xf32, #tpu.memory_space<vmem>>, vector<8x128xf32>
      tpu.vector_store %arg3[%c0_11, %c0_12], %17 {strides = array<i32>} : memref<8x128xf32, #tpu.memory_space<vmem>>, vector<8x128xf32>,
      %cst_13 = arith.constant 0.000000e+00 : f32
      %19 = vector.broadcast %cst_13 : f32 to vector<8x128xf32>
      %c0_14 = arith.constant 0 : index
      %c0_15 = arith.constant 0 : index
      %20 = vector.load %arg4[%c0_14, %c0_15] : memref<8x128xf32, #tpu.memory_space<vmem>>, vector<8x128xf32>
      tpu.vector_store %arg4[%c0_14, %c0_15], %19 {strides = array<i32>} : memref<8x128xf32, #tpu.memory_space<vmem>>, vector<8x128xf32>,
    } else {
    }
    %cst = arith.constant 0.000000e+00 : f32
    %3 = vector.broadcast %cst : f32 to vector<8x128xf32>
    %c0_i32_1 = arith.constant 0 : i32
    %c8_i32 = arith.constant 8 : i32
    %4 = arith.muli %c0_i32_1, %c8_i32 : i32
    %5 = tpu.assume_multiple %4, 8 : i32
    %6 = arith.index_cast %5 : i32 to index
    %c0 = arith.constant 0 : index
    %7 = vector.load %arg2[%6, %c0] : memref<8x128xf32, #tpu.memory_space<vmem>>, vector<8x128xf32>
    %8 = arith.addf %3, %7 : vector<8x128xf32>
    %9 = arith.mulf %7, %7 : vector<8x128xf32>
    %10 = arith.addf %3, %9 : vector<8x128xf32>
    %c1_i32 = arith.constant 1 : i32
    %c0_2 = arith.constant 0 : index
    %c0_3 = arith.constant 0 : index
    %11 = vector.load %arg3[%c0_2, %c0_3] : memref<8x128xf32, #tpu.memory_space<vmem>>, vector<8x128xf32>
    %12 = arith.addf %11, %8 : vector<8x128xf32>
    %c0_4 = arith.constant 0 : index
    %c0_5 = arith.constant 0 : index
    %13 = vector.load %arg3[%c0_4, %c0_5] : memref<8x128xf32, #tpu.memory_space<vmem>>, vector<8x128xf32>
    tpu.vector_store %arg3[%c0_4, %c0_5], %12 {strides = array<i32>} : memref<8x128xf32, #tpu.memory_space<vmem>>, vector<8x128xf32>,
    %c0_6 = arith.constant 0 : index
    %c0_7 = arith.constant 0 : index
    %14 = vector.load %arg4[%c0_6, %c0_7] : memref<8x128xf32, #tpu.memory_space<vmem>>, vector<8x128xf32>
    %15 = arith.addf %14, %10 : vector<8x128xf32>
    %c0_8 = arith.constant 0 : index
    %c0_9 = arith.constant 0 : index
    %16 = vector.load %arg4[%c0_8, %c0_9] : memref<8x128xf32, #tpu.memory_space<vmem>>, vector<8x128xf32>
    tpu.vector_store %arg4[%c0_8, %c0_9], %15 {strides = array<i32>} : memref<8x128xf32, #tpu.memory_space<vmem>>, vector<8x128xf32>,
    return
  }
  func.func @transform_0(%arg0: i32, %arg1: i32) -> (i32, i32) {
    %c1_i32 = arith.constant 1 : i32
    %0 = arith.muli %arg0, %c1_i32 : i32
    %1 = arith.addi %0, %arg1 : i32
    %c0_i32 = arith.constant 0 : i32
    %c0_i32_0 = arith.constant 0 : i32
    return %1, %c0_i32 : i32, i32
  }
  func.func @transform_1(%arg0: i32, %arg1: i32) -> (i32, i32) {
    %c0_i32 = arith.constant 0 : i32
    %c0_i32_0 = arith.constant 0 : i32
    return %arg0, %c0_i32 : i32, i32
  }
  func.func @transform_2(%arg0: i32, %arg1: i32) -> (i32, i32) {
    %c0_i32 = arith.constant 0 : i32
    %c0_i32_0 = arith.constant 0 : i32
    return %arg0, %c0_i32 : i32, i32
  }
}

module attributes {stable_mosaic.version = 11 : i64} {
  func.func @_normalize_kernel(%arg0: i32, %arg1: memref<8x128xf32, #tpu.memory_space<vmem>>, %arg2: memref<2x128xf32, #tpu.memory_space<vmem>>, %arg3: memref<8x128xf32, #tpu.memory_space<vmem>>) attributes {dimension_semantics = [#tpu.dimension_semantics<parallel>], iteration_bounds = array<i64: 1>, scalar_prefetch = 0 : i64, scratch_operands = 0 : i64, tpu.core_type = #tpu.core_type<tc>, window_params = [{transform_indices = @transform_0, window_bounds = array<i64: 8, 128>}, {pipeline_mode = #tpu.pipeline_mode<synchronous>, transform_indices = @transform_1, window_bounds = array<i64: 2, 128>}, {transform_indices = @transform_2, window_bounds = array<i64: 8, 128>}]} {
    %c0 = arith.constant 0 : index
    %c0_0 = arith.constant 0 : index
    %0 = vector.load %arg1[%c0, %c0_0] : memref<8x128xf32, #tpu.memory_space<vmem>>, vector<8x128xf32>
    %c0_1 = arith.constant 0 : index
    %c0_2 = arith.constant 0 : index
    %1 = vector.load %arg2[%c0_1, %c0_2] : memref<2x128xf32, #tpu.memory_space<vmem>>, vector<1x128xf32>
    %c1 = arith.constant 1 : index
    %c0_3 = arith.constant 0 : index
    %2 = vector.load %arg2[%c1, %c0_3] : memref<2x128xf32, #tpu.memory_space<vmem>>, vector<1x128xf32>
    %3 = vector.broadcast %1 : vector<1x128xf32> to vector<8x128xf32>
    %4 = arith.mulf %0, %3 : vector<8x128xf32>
    %5 = vector.broadcast %2 : vector<1x128xf32> to vector<8x128xf32>
    %6 = arith.addf %4, %5 : vector<8x128xf32>
    %c0_4 = arith.constant 0 : index
    %c0_5 = arith.constant 0 : index
    %7 = vector.load %arg3[%c0_4, %c0_5] : memref<8x128xf32, #tpu.memory_space<vmem>>, vector<8x128xf32>
    tpu.vector_store %arg3[%c0_4, %c0_5], %6 {strides = array<i32>} : memref<8x128xf32, #tpu.memory_space<vmem>>, vector<8x128xf32>,
    return
  }
  func.func @transform_0(%arg0: i32) -> (i32, i32) {
    %c0_i32 = arith.constant 0 : i32
    %c0_i32_0 = arith.constant 0 : i32
    return %arg0, %c0_i32 : i32, i32
  }
  func.func @transform_1(%arg0: i32) -> (i32, i32) {
    %c0_i32 = arith.constant 0 : i32
    %c0_i32_0 = arith.constant 0 : i32
    %c0_i32_1 = arith.constant 0 : i32
    return %c0_i32, %c0_i32_0 : i32, i32
  }
  func.func @transform_2(%arg0: i32) -> (i32, i32) {
    %c0_i32 = arith.constant 0 : i32
    %c0_i32_0 = arith.constant 0 : i32
    return %arg0, %c0_i32 : i32, i32
  }
}

</mosaic_0001>

<llo_original>
// kernel: tile.19
$region0: #{tile.19}
  %s0 = inlined_call_operand.vmem [shape: f32[4,32], index: 0, kind: input, shape index: {}]
  %s1 = inlined_call_operand.vmem [shape: f32[1,128], index: 1, kind: output, shape index: {}]
  $region1: #{tile.19} parent=0
    #allocation0 [shape = 'u8[4096]{0}', space=vmem, size = 0x1000, scoped, tag = 'scoped mem for output reshape']
    #allocation1 [shape = 'u8[4096]{0}', space=vmem, size = 0x1000, scoped, tag = 'scoped mem for input reshape']
    %s3 = sshll.u32 1, 4
    %s4 = ssub.s32 %s3, 1
    %v5 = vld [vmem:[%s0] sm:%s4]
    %6 = vst [vmem:[#allocation1] sm:%s4] %v5
    %v7 = vld [vmem:[#allocation1] sm:$0x1]
    %vm8 = vcmask 261120
    %9 = vst.msk [vmem:[#allocation0] sm:$0x1] %vm8, %v7
    %s10 = scalar_lea.vmem [#allocation1], 3
    %v11 = vld [vmem:[%s10] sm:$0x1]
    %12 = vrot.lane.b32.xlu0 %v11, 96
    %v13 = vpop.permute.xlu0 %12
    %vm14 = vcmask 1048320
    %15 = vst.msk [vmem:[#allocation0] sm:$0x1] %vm14, %v13
    %s16 = scalar_lea.vmem [#allocation1], 2
    %v17 = vld [vmem:[%s16] sm:$0x1]
    %18 = vrot.lane.b32.xlu0 %v17, 64
    %v19 = vpop.permute.xlu0 %18
    %vm20 = vcmask 785920
    %21 = vst.msk [vmem:[#allocation0] sm:$0x1] %vm20, %v19
    %s22 = scalar_lea.vmem [#allocation1], 1
    %v23 = vld [vmem:[%s22] sm:$0x1]
    %24 = vrot.lane.b32.xlu0 %v23, 32
    %v25 = vpop.permute.xlu0 %24
    %vm26 = vcmask 523520
    %27 = vst.msk [vmem:[#allocation0] sm:$0x1] %vm26, %v25
    %s29 = sshll.u32 1, 1
    %s30 = ssub.s32 %s29, 1
    %v32 = vld [vmem:[#allocation0] sm:%s30]
    %s33 = sshll.u32 1, 1
    %s34 = ssub.s32 %s33, 1
    %35 = vst [vmem:[%s1] sm:%s34] %v32

// kernel: tile.18
$region0: #{tile.18}
  #allocation0 [shape = 's32[1]{0}', space=sflag, size = 0x4, scoped, tag = 'scoped memory for tile.18']
  %s0 = inlined_call_operand.vmem [shape: f32[32], index: 0, kind: input, shape index: {}]
  %s1 = inlined_call_operand.vmem [shape: f32[4,32], index: 1, kind: output, shape index: {}]
  // Predicated region
  $region2: #{tile.18} parent=0 // pred_check
    _
  $region3: #{tile.18} parent=0 // pred_check_branch
    %3 = sbr.rel (0) target = $region5
  $region4: #{tile.18} parent=0 // pred_region
    _
  $region5: #{tile.18} parent=0 // pred_fallthru
    _
  %v4 = vld [vmem:[%s0] ss:$0 sm:$0xff]
  %5 = vst [vmem:[%s1] sm:$0xf] %v4

// kernel: normalizer_forward.2
$region0: #{normalizer_forward.2}
  #allocation0 [shape = 'u32[]', space=smem, size = 0x4, offset = 0x4, fixed_abs, tag = 'smem constant byte address 0x4 - core index']
  #allocation1 [shape = 'u32[144,128]{1,0:T(1,128)}', space=vmem, size = 0x12000, scoped, tag = 'internal scratch']
  %s0 = inlined_call_operand.vmem [shape: f32[8,128], index: 0, kind: input, shape index: {}]
  %s1 = inlined_call_operand.vmem [shape: f32[8,128], index: 1, kind: output, shape index: {0}]
  %s2 = inlined_call_operand.vmem [shape: f32[8,128], index: 2, kind: output, shape index: {1}]
  %3 = xla_tuple %s1, %s2
  %s4 = sld [smem:[#allocation0]]
  $region26: #{normalizer_forward.2} parent=0
    _
  %s6 = ssub.s32 1, %s4
  %s7 = scalar_select 0, %s6, %s4
  // Predicated region
  $region2: #{normalizer_forward.2} parent=0 // pred_check
    _
  $region3: #{normalizer_forward.2} parent=0 // pred_check_branch
    %9 = sbr.rel (0) target = $region5
  $region4: #{normalizer_forward.2} parent=0 // pred_region
    %s10 = sadd.s32 0, 0
    %p11 = scmp.lt.s32.totalorder %s10, 0
    %s12 = scalar_select %p11, %s10, 0
    %s13 = smul.addr %s12, 8
    %s14 = scalar_lea.vmem %s0, %s13
    %s15 = sadd.s32 0, 0
  $region5: #{normalizer_forward.2} parent=0 // pred_fallthru
    _
  %s16 = sadd.s32 0, 0
  %p17 = scmp.lt.s32.totalorder %s16, 0
  %s18 = scalar_select %p17, %s16, 0
  %s19 = smul.addr %s18, 8
  %s20 = scalar_lea.vmem %s0, %s19
  %s21 = sadd.s32 0, 0
  %p22 = scmp.lt.s32.totalorder %s21, 0
  %s23 = scalar_select %p22, %s21, 0
  %s24 = smul.addr %s23, 8
  %s25 = scalar_lea.vmem %s0, %s24
  %s26 = sadd.s32 0, 0
  %p27 = scmp.eq.s32.totalorder 0, 0
  // Predicated region
  $region6: #{normalizer_forward.2} parent=0 // pred_check
    %p28 = pneg %p27
  $region7: #{normalizer_forward.2} parent=0 // pred_check_branch
    %30 = sbr.rel (%p28) target = $region9
  $region8: #{normalizer_forward.2} parent=0 // pred_region
    %31 = vst [vmem:[%s1] sm:$0xff] 0.0
    %32 = vst [vmem:[%s2] sm:$0xff] 0.0
  $region9: #{normalizer_forward.2} parent=0 // pred_fallthru
    _
  %v33 = vld [vmem:[%s25] sm:$0xff]
  %v34 = vadd.f32 %v33, 0.0
  %v35 = vmul.f32 %v33, %v33
  %v36 = vadd.f32 %v35, 0.0
  %v37 = vld [vmem:[%s1] sm:$0xff]
  %v38 = vadd.f32 %v37, %v34
  %39 = vst [vmem:[%s1] sm:$0xff] %v38
  %v40 = vld [vmem:[%s2] sm:$0xff]
  %v41 = vadd.f32 %v40, %v36
  %42 = vst [vmem:[%s2] sm:$0xff] %v41
  // Predicated region
  $region10: #{normalizer_forward.2} parent=0 // pred_check
    _
  $region11: #{normalizer_forward.2} parent=0 // pred_check_branch
    %44 = sbr.rel (0) target = $region13
  $region12: #{normalizer_forward.2} parent=0 // pred_region
    _
  $region13: #{normalizer_forward.2} parent=0 // pred_fallthru
    _
  // Predicated region
  $region14: #{normalizer_forward.2} parent=0 // pred_check
    _
  $region15: #{normalizer_forward.2} parent=0 // pred_check_branch
    %46 = sbr.rel (0) target = $region17
  $region16: #{normalizer_forward.2} parent=0 // pred_region
    _
  $region17: #{normalizer_forward.2} parent=0 // pred_fallthru
    _
  // Predicated region
  $region18: #{normalizer_forward.2} parent=0 // pred_check
    _
  $region19: #{normalizer_forward.2} parent=0 // pred_check_branch
    %48 = sbr.rel (0) target = $region21
  $region20: #{normalizer_forward.2} parent=0 // pred_region
    _
  $region21: #{normalizer_forward.2} parent=0 // pred_fallthru
    _
  // Predicated region
  $region22: #{normalizer_forward.2} parent=0 // pred_check
    _
  $region23: #{normalizer_forward.2} parent=0 // pred_check_branch
    %50 = sbr.rel (0) target = $region25
  $region24: #{normalizer_forward.2} parent=0 // pred_region
    _
  $region25: #{normalizer_forward.2} parent=0 // pred_fallthru
    _

// kernel: normalizer_forward.3
$region0: #{normalizer_forward.3}
  #allocation0 [shape = 'u32[]', space=smem, size = 0x4, offset = 0x4, fixed_abs, tag = 'smem constant byte address 0x4 - core index']
  #allocation1 [shape = 'u32[144,128]{1,0:T(1,128)}', space=vmem, size = 0x12000, scoped, tag = 'internal scratch']
  %s0 = inlined_call_operand.vmem [shape: f32[8,128], index: 0, kind: input, shape index: {}]
  %s1 = inlined_call_operand.vmem [shape: f32[2,128], index: 1, kind: input, shape index: {}]
  %s2 = inlined_call_operand.vmem [shape: f32[8,128], index: 2, kind: output, shape index: {}]
  %s3 = sld [smem:[#allocation0]]
  $region18: #{normalizer_forward.3} parent=0
    _
  %s5 = ssub.s32 1, %s3
  %s6 = scalar_select 0, %s5, %s3
  // Predicated region
  $region2: #{normalizer_forward.3} parent=0 // pred_check
    _
  $region3: #{normalizer_forward.3} parent=0 // pred_check_branch
    %8 = sbr.rel (0) target = $region5
  $region4: #{normalizer_forward.3} parent=0 // pred_region
    _
  $region5: #{normalizer_forward.3} parent=0 // pred_fallthru
    _
  // Predicated region
  $region6: #{normalizer_forward.3} parent=0 // pred_check
    _
  $region7: #{normalizer_forward.3} parent=0 // pred_check_branch
    %10 = sbr.rel (0) target = $region9
  $region8: #{normalizer_forward.3} parent=0 // pred_region
    _
  $region9: #{normalizer_forward.3} parent=0 // pred_fallthru
    _
  %v11 = vld [vmem:[%s0] sm:$0xff]
  %v12 = vld [vmem:[%s1] sm:$0x1]
  %v13 = vld [vmem:[%s1 + $0x1] sm:$0x1]
  %v14 = vlaneseq
  %v15 = vshrl.u32 %v14, 7
  %v16 = vsub.s32 0, %v15
  %v17 = vrot.slane %v12, %v16
  %v18 = vmul.f32 %v11, %v17
  %v19 = vlaneseq
  %v20 = vshrl.u32 %v19, 7
  %v21 = vsub.s32 0, %v20
  %v22 = vrot.slane %v13, %v21
  %v23 = vadd.f32 %v18, %v22
  %24 = vst [vmem:[%s2] sm:$0xff] %v23
  // Predicated region
  $region10: #{normalizer_forward.3} parent=0 // pred_check
    _
  $region11: #{normalizer_forward.3} parent=0 // pred_check_branch
    %26 = sbr.rel (0) target = $region13
  $region12: #{normalizer_forward.3} parent=0 // pred_region
    _
  $region13: #{normalizer_forward.3} parent=0 // pred_fallthru
    _
  // Predicated region
  $region14: #{normalizer_forward.3} parent=0 // pred_check
    _
  $region15: #{normalizer_forward.3} parent=0 // pred_check_branch
    %28 = sbr.rel (0) target = $region17
  $region16: #{normalizer_forward.3} parent=0 // pred_region
    _
  $region17: #{normalizer_forward.3} parent=0 // pred_fallthru
    _

</llo_original>
